<compile_context>
chip_gen: v7x
topology: tpu7x:2x2x1
jax: 0.10.0
libtpu: 0.0.40
codegen_flags: <defaults>
</compile_context>

<pallas_src>
import functools

import jax
import jax.numpy as jnp
from jax.experimental import pallas as pl
from jax.experimental.pallas import tpu as pltpu


def _round_up(x, m):
    return (x + m - 1) // m * m


def linear_kernel(x_ref, w_ref, b_ref, o_ref):
    # x_ref: (TB, E), w_ref: (E, Lp), b_ref: (1, Lp), o_ref: (TB, Lp)
    acc = jnp.dot(x_ref[...], w_ref[...], preferred_element_type=jnp.float32)
    acc = acc + b_ref[...].astype(jnp.float32)  # broadcast bias over batch rows
    o_ref[...] = acc.astype(o_ref.dtype)


@functools.partial(jax.jit, static_argnames=("block_b",))
def simple_classifier_forward(x, weight, bias, block_b=512):
    """Computes x @ weight.T + bias with a Pallas TPU kernel.

    x:      (B, E) float32
    weight: (L, E) float32   (PyTorch nn.Linear layout)
    bias:   (L,)   float32
    returns (B, L) float32
    """
    B, E = x.shape
    L = weight.shape[0]

    # Lane-dense output: pad the label dim up to a multiple of 128.
    Lp = max(128, _round_up(L, 128))

    # Present the weight to the MXU in native (K, N) = (E, Lp) layout.
    # Transpose + zero-pad happen once at trace time (amortized over all calls).
    w_t = jnp.zeros((E, Lp), dtype=weight.dtype).at[:, :L].set(weight.T)
    b_p = jnp.zeros((1, Lp), dtype=bias.dtype).at[0, :L].set(bias)

    # Batch tile: as large as requested, but clamped so tiny inputs run in a
    # single grid step; kept a multiple of 8 (f32 sublane granularity).
    tb = min(block_b, _round_up(B, 8))
    grid = (pl.cdiv(B, tb),)

    # VMEM budget: double-buffered x tile + single-buffered weight/bias +
    # double-buffered output tile, with 2x headroom; cap below v7x's 64 MiB.
    vmem_needed = (2 * tb * E + E * Lp + Lp + 2 * tb * Lp) * 4
    vmem_limit = int(min(64 * 2**20, max(16 * 2**20, 2 * vmem_needed)))

    cost = pl.CostEstimate(
        flops=2 * B * E * Lp,
        transcendentals=0,
        bytes_accessed=4 * (B * E + E * Lp + Lp + B * Lp),
    )

    out_padded = pl.pallas_call(
        linear_kernel,
        out_shape=jax.ShapeDtypeStruct((B, Lp), x.dtype),
        grid_spec=pltpu.PrefetchScalarGridSpec(
            num_scalar_prefetch=0,
            grid=grid,
            in_specs=[
                # Streamed x tile (double-buffered by default).
                pl.BlockSpec((tb, E), lambda i: (i, 0)),
                # Resident weight: constant index_map -> single buffer.
                pl.BlockSpec((E, Lp), lambda i: (0, 0),
                             pipeline_mode=pl.Buffered(1)),
                # Resident bias row: single buffer.
                pl.BlockSpec((1, Lp), lambda i: (0, 0),
                             pipeline_mode=pl.Buffered(1)),
            ],
            out_specs=pl.BlockSpec((tb, Lp), lambda i: (i, 0)),
        ),
        compiler_params=pltpu.CompilerParams(
            dimension_semantics=("parallel",),
            vmem_limit_bytes=vmem_limit,
        ),
        cost_estimate=cost,
    )(x, w_t, b_p)

    # Drop the lane padding to recover the (B, L) logits.
    return out_padded[:, :L]


if __name__ == "__main__":
    # Small shapes consistent with SimpleClassifier(embedding_dim, num_labels).
    batch = 8
    embedding_dim = 32
    num_labels = 16

    key = jax.random.PRNGKey(0)
    kx, kw, kb = jax.random.split(key, 3)

    x = jax.random.normal(kx, (batch, embedding_dim), dtype=jnp.float32)
    # Deterministic parameter init mimicking nn.Linear's uniform(-1/sqrt(E), 1/sqrt(E)).
    bound = 1.0 / (embedding_dim ** 0.5)
    weight = jax.random.uniform(
        kw, (num_labels, embedding_dim), dtype=jnp.float32, minval=-bound, maxval=bound
    )
    bias = jax.random.uniform(
        kb, (num_labels,), dtype=jnp.float32, minval=-bound, maxval=bound
    )

    out = simple_classifier_forward(x, weight, bias)
    out = jax.block_until_ready(out)

    # Correctness check against plain JAX reference.
    ref = x @ weight.T + bias
    assert out.shape == (batch, num_labels)
    assert jnp.allclose(out, ref, atol=1e-5, rtol=1e-5)

    print("KERNEL_OK")
</pallas_src>

<mosaic_0001>
module attributes {stable_mosaic.version = 11 : i64} {
  func.func @linear_kernel(%arg0: i32, %arg1: memref<8x32xf32, #tpu.memory_space<vmem>>, %arg2: memref<32x128xf32, #tpu.memory_space<vmem>>, %arg3: memref<1x128xf32, #tpu.memory_space<vmem>>, %arg4: memref<8x128xf32, #tpu.memory_space<vmem>>) attributes {dimension_semantics = [#tpu.dimension_semantics<parallel>], iteration_bounds = array<i64: 1>, scalar_prefetch = 0 : i64, scratch_operands = 0 : i64, tpu.core_type = #tpu.core_type<tc>, window_params = [{transform_indices = @transform_0, window_bounds = array<i64: 8, 32>}, {pipeline_mode = #tpu.pipeline_mode<synchronous>, transform_indices = @transform_1, window_bounds = array<i64: 32, 128>}, {pipeline_mode = #tpu.pipeline_mode<synchronous>, transform_indices = @transform_2, window_bounds = array<i64: 1, 128>}, {transform_indices = @transform_3, window_bounds = array<i64: 8, 128>}]} {
    %c0 = arith.constant 0 : index
    %c0_0 = arith.constant 0 : index
    %0 = vector.load %arg1[%c0, %c0_0] : memref<8x32xf32, #tpu.memory_space<vmem>>, vector<8x32xf32>
    %c0_1 = arith.constant 0 : index
    %c0_2 = arith.constant 0 : index
    %1 = vector.load %arg2[%c0_1, %c0_2] : memref<32x128xf32, #tpu.memory_space<vmem>>, vector<32x128xf32>
    %cst = arith.constant dense<0.000000e+00> : vector<8x128xf32>
    %2 = tpu.matmul %0, %1, %cst {dimension_numbers = #tpu.dot_dimension_numbers<[1], [0], [0], [1], [0, 0, 1, 1], [], []>} : vector<8x32xf32>, vector<32x128xf32>, vector<8x128xf32> -> vector<8x128xf32>
    %c0_3 = arith.constant 0 : index
    %c0_4 = arith.constant 0 : index
    %3 = vector.load %arg3[%c0_3, %c0_4] : memref<1x128xf32, #tpu.memory_space<vmem>>, vector<1x128xf32>
    %4 = vector.broadcast %3 : vector<1x128xf32> to vector<8x128xf32>
    %5 = arith.addf %2, %4 : vector<8x128xf32>
    %c0_5 = arith.constant 0 : index
    %c0_6 = arith.constant 0 : index
    %6 = vector.load %arg4[%c0_5, %c0_6] : memref<8x128xf32, #tpu.memory_space<vmem>>, vector<8x128xf32>
    tpu.vector_store %arg4[%c0_5, %c0_6], %5 {strides = array<i32>} : memref<8x128xf32, #tpu.memory_space<vmem>>, vector<8x128xf32>,
    return
  }
  func.func @transform_0(%arg0: i32) -> (i32, i32) {
    %c0_i32 = arith.constant 0 : i32
    %c0_i32_0 = arith.constant 0 : i32
    return %arg0, %c0_i32 : i32, i32
  }
  func.func @transform_1(%arg0: i32) -> (i32, i32) {
    %c0_i32 = arith.constant 0 : i32
    %c0_i32_0 = arith.constant 0 : i32
    %c0_i32_1 = arith.constant 0 : i32
    return %c0_i32, %c0_i32_0 : i32, i32
  }
  func.func @transform_2(%arg0: i32) -> (i32, i32) {
    %c0_i32 = arith.constant 0 : i32
    %c0_i32_0 = arith.constant 0 : i32
    %c0_i32_1 = arith.constant 0 : i32
    return %c0_i32, %c0_i32_0 : i32, i32
  }
  func.func @transform_3(%arg0: i32) -> (i32, i32) {
    %c0_i32 = arith.constant 0 : i32
    %c0_i32_0 = arith.constant 0 : i32
    return %arg0, %c0_i32 : i32, i32
  }
}

</mosaic_0001>

<llo_original>
// kernel: simple_classifier_forward.1
$region0: #{simple_classifier_forward.1}
  #allocation0 [shape = 'u32[]', space=smem, size = 0x4, offset = 0x4, fixed_abs, tag = 'smem constant byte address 0x4 - core index']
  #allocation1 [shape = 'u32[144,128]{1,0:T(1,128)}', space=vmem, size = 0x12000, scoped, tag = 'internal scratch']
  %s0 = inlined_call_operand.vmem [shape: f32[8,32], index: 0, kind: input, shape index: {}]
  %s1 = inlined_call_operand.vmem [shape: f32[32,128], index: 1, kind: input, shape index: {}]
  %s2 = inlined_call_operand.vmem [shape: f32[1,128], index: 2, kind: input, shape index: {}]
  %s3 = inlined_call_operand.hbm [shape: f32[8,128], index: 3, kind: output, shape index: {}]
  %s4 = sld [smem:[#allocation0]]
  $region22: #{simple_classifier_forward.1} parent=0
    _
  %s6 = ssub.s32 1, %s4
  %s7 = scalar_select 0, %s6, %s4
  $region1: #{simple_classifier_forward.1} parent=0
    #allocation2 [shape = 'u8[4096]{0}', space=vmem, size = 0x1000, scoped, tag = 'output window, operand 0, single buffered']
    #allocation3 [shape = 's32[1]{0}', space=sflag, size = 0x4, scoped, tag = 'scoped memory for simple_classifier_forward.1']
    %8 = vsyncpa [#allocation3], 0
    // Predicated region
    $region2: #{simple_classifier_forward.1} parent=1 // pred_check
      _
    $region3: #{simple_classifier_forward.1} parent=1 // pred_check_branch
      %10 = sbr.rel (0) target = $region5
    $region4: #{simple_classifier_forward.1} parent=1 // pred_region
      _
    $region5: #{simple_classifier_forward.1} parent=1 // pred_fallthru
      _
    // Predicated region
    $region6: #{simple_classifier_forward.1} parent=1 // pred_check
      _
    $region7: #{simple_classifier_forward.1} parent=1 // pred_check_branch
      %12 = sbr.rel (0) target = $region9
    $region8: #{simple_classifier_forward.1} parent=1 // pred_region
      _
    $region9: #{simple_classifier_forward.1} parent=1 // pred_fallthru
      _
    // Predicated region
    $region10: #{simple_classifier_forward.1} parent=1 // pred_check
      _
    $region11: #{simple_classifier_forward.1} parent=1 // pred_check_branch
      %14 = sbr.rel (0) target = $region13
    $region12: #{simple_classifier_forward.1} parent=1 // pred_region
      _
    $region13: #{simple_classifier_forward.1} parent=1 // pred_fallthru
      _
    %v15 = vld [vmem:[%s0] sm:$0xff]
    %v16 = vld [vmem:[%s1] sm:$0xff]
    %v17 = vld [vmem:[%s1 + $0x8] sm:$0xff]
    %v18 = vld [vmem:[%s1 + $0x10] sm:$0xff]
    %v19 = vld [vmem:[%s1 + $0x18] sm:$0xff]
    %v20 = vld [vmem:[%s2] sm:$0x1]
    %v22 = vlaneseq
    %v23 = vshrl.u32 %v22, 7
    %v24 = vsub.s32 0, %v23
    %v25 = vrot.slane %v20, %v24
    %vm27 = vcmask 261120
    %v29 = vsel %vm27, %v15, 0
    %31 = vmatprep.subr.mxu0 0.0
    %32 = vmatpush1.msra.mxu0 %v16
    %33 = vmatprep.subr.mxu0 0.0
    %34 = vmatpush1.msra.mxu0 %v17
    %35 = vmatprep.subr.mxu0 0.0
    %36 = vmatpush1.msra.mxu0 %v18
    %37 = vmatprep.subr.mxu0 0.0
    %38 = vmatpush1.msra.mxu0 %v19
    %39 = vmatprep.subr.mxu0 0.0
    %40 = vmatpush1.msra.mxu0 0.0
    %41 = vmatprep.subr.mxu0 0.0
    %42 = vmatpush1.msra.mxu0 0.0
    %43 = vmatprep.subr.mxu0 0.0
    %44 = vmatpush1.msra.mxu0 0.0
    %45 = vmatprep.subr.mxu0 0.0
    %46 = vmatpush1.msra.mxu0 0.0
    %47 = vmatprep.subr.mxu0 0.0
    %48 = vmatpush1.msra.mxu0 0.0
    %49 = vmatprep.subr.mxu0 0.0
    %50 = vmatpush1.msra.mxu0 0.0
    %51 = vmatprep.subr.mxu0 0.0
    %52 = vmatpush1.msra.mxu0 0.0
    %53 = vmatprep.subr.mxu0 0.0
    %54 = vmatpush1.msra.mxu0 0.0
    %55 = vmatprep.subr.mxu0 0.0
    %56 = vmatpush1.msra.mxu0 0.0
    %57 = vmatprep.subr.mxu0 0.0
    %58 = vmatpush1.msra.mxu0 0.0
    %59 = vmatprep.subr.mxu0 0.0
    %60 = vmatpush1.msra.mxu0 0.0
    %61 = vmatprep.subr.mxu0 0.0
    %62 = vmatpush1.msra.mxu0 0.0
    %63 = vmatprep.subr.mxu0 0.0
    %64 = vmatpush1.msra.mxu0 0.0
    %65 = vmatprep.subr.mxu0 0.0
    %66 = vmatpush1.msra.mxu0 0.0
    %67 = vmatprep.subr.mxu0 0.0
    %68 = vmatpush1.msra.mxu0 0.0
    %69 = vmatprep.subr.mxu0 0.0
    %70 = vmatpush1.msra.mxu0 0.0
    %71 = vmatprep.subr.mxu0 0.0
    %72 = vmatpush1.msra.mxu0 0.0
    %73 = vmatprep.subr.mxu0 0.0
    %74 = vmatpush1.msra.mxu0 0.0
    %75 = vmatprep.subr.mxu0 0.0
    %76 = vmatpush1.msra.mxu0 0.0
    %77 = vmatprep.subr.mxu0 0.0
    %78 = vmatpush1.msra.mxu0 0.0
    %79 = vmatprep.subr.mxu0 0.0
    %80 = vmatpush1.msra.mxu0 0.0
    %81 = vmatprep.subr.mxu0 0.0
    %82 = vmatpush1.msra.mxu0 0.0
    %83 = vmatprep.subr.mxu0 0.0
    %84 = vmatpush1.msra.mxu0 0.0
    %85 = vmatprep.subr.mxu0 0.0
    %86 = vmatpush1.msra.mxu0 0.0
    %87 = vmatprep.subr.mxu0 0.0
    %88 = vmatpush1.msra.mxu0 0.0
    %89 = vmatprep.subr.mxu0 0.0
    %90 = vmatpush1.msra.mxu0 0.0
    %91 = vmatprep.subr.mxu0 0.0
    %92 = vmatpush1.msra.mxu0 0.0
    %93 = vmatprep.subr.mxu0 0.0
    %94 = vmatpush1.msra.mxu0 0.0
    %95 = vmatprep.mubr.f32.mxu0 0.0
    %96 = vmatmul.mubr.f32.gmra.mrb[0].mxu0 %v29
    %v97 = vpop.f32.mrb[0].mxu0
    %v98 = vadd.f32 %v25, %v97
    %v99 = vpop.f32.mrb[0].mxu0
    %100 = vdwg.mxu0
    %101 = vst [vmem:[#allocation2] sm:$0xff] %v98
    // Predicated region
    $region14: #{simple_classifier_forward.1} parent=1 // pred_check
      _
    $region15: #{simple_classifier_forward.1} parent=1 // pred_check_branch
      %103 = sbr.rel (0) target = $region17
    $region16: #{simple_classifier_forward.1} parent=1 // pred_region
      %s105 = ssub.s32 128, 128
      %106 = vsyncadd [#allocation3], %s105
      %s108 = sshll.u32 [#allocation2], 4
      %s109 = int_to_ptr.vmem [resolvable:$true] %s108
      %111 = dma.vmem_to_hbm [thread:$0]  %s109, 128, %s3, [#allocation3]
    $region17: #{simple_classifier_forward.1} parent=1 // pred_fallthru
      _
    // Predicated region
    $region18: #{simple_classifier_forward.1} parent=1 // pred_check
      _
    $region19: #{simple_classifier_forward.1} parent=1 // pred_check_branch
      %113 = sbr.rel (0) target = $region21
    $region20: #{simple_classifier_forward.1} parent=1 // pred_region
      %114 = dma.done [#allocation3], 128
    $region21: #{simple_classifier_forward.1} parent=1 // pred_fallthru
      _
    %115 = vsyncpa [#allocation3], 1

</llo_original>
